<compile_context>
chip_gen: v7x
topology: tpu7x:2x2x1
jax: 0.10.0
libtpu: 0.0.40
codegen_flags: <defaults>
</compile_context>

<pallas_src>
import functools

import jax
import jax.numpy as jnp
from jax.experimental import pallas as pl
from jax.experimental.pallas import tpu as pltpu


def _mlp_kernel(x_ref, w1_ref, b1_ref, w2_ref, b2_ref, o_ref):
    """One row-tile: out = relu(x @ W1 + b1) @ W2 + b2 + x (f32 accumulate + residual)."""
    x = x_ref[...]                                       # (bm, F) in the caller's dtype
    # bf16 operands feed the MXU at full rate; accumulate in f32.
    h = jnp.dot(x.astype(w1_ref.dtype), w1_ref[...],
                preferred_element_type=jnp.float32)      # (bm, H) on the MXU
    h = jnp.maximum(h + b1_ref[...], 0.0)                # bias + ReLU on the VPU (f32)
    y = jnp.dot(h.astype(w2_ref.dtype), w2_ref[...],
                preferred_element_type=jnp.float32)      # (bm, F) on the MXU
    y = y + b2_ref[...] + x.astype(jnp.float32)          # bias + f32 residual
    o_ref[...] = y.astype(o_ref.dtype)


def _round_up(v, m):
    return ((v + m - 1) // m) * m


def _choose_bm(n, block_m):
    """Pick a row tile: big enough to amortize per-step overhead, small enough that
    mid-sized batches produce >= 2 grid steps (so v7x's two TensorCores both engage)."""
    two_way = max(16, _round_up(pl.cdiv(n, 2), 16))   # ~half the batch, 16-aligned
    bm = min(block_m, two_way)
    bm = min(bm, _round_up(n, 8))                     # never (much) larger than the batch
    return max(8, bm)


@functools.partial(jax.jit, static_argnames=("block_m", "compute_dtype", "out_dtype"))
def mlp_forward(x, w1, b1, w2, b2, *, block_m=1024,
                compute_dtype=jnp.bfloat16, out_dtype=None):
    """Tile the batch dimension; keep the (small) weights resident in VMEM."""
    n, f = x.shape
    hdim = w1.shape[1]
    assert block_m % 16 == 0, "block_m must be a multiple of 16 (bf16 sublane packing)"
    out_dtype = x.dtype if out_dtype is None else out_dtype

    # MXU operands in bf16 (no-op if the caller already pre-cast); biases exact f32.
    w1c = w1.astype(compute_dtype)
    w2c = w2.astype(compute_dtype)
    b1f = b1.astype(jnp.float32)
    b2f = b2.astype(jnp.float32)

    bm = _choose_bm(n, block_m)
    grid = (pl.cdiv(n, bm),)          # ragged last block handled by Pallas masking

    const = dict(pipeline_mode=pl.Buffered(1))   # weights/biases: one resident buffer
    return pl.pallas_call(
        _mlp_kernel,
        out_shape=jax.ShapeDtypeStruct((n, f), out_dtype),
        grid_spec=pl.GridSpec(
            grid=grid,
            in_specs=[
                pl.BlockSpec((bm, f), lambda i: (i, 0)),             # x row-tile (pipelined)
                pl.BlockSpec((f, hdim), lambda i: (0, 0), **const),  # W1 (full, VMEM-resident)
                pl.BlockSpec((1, hdim), lambda i: (0, 0), **const),  # b1
                pl.BlockSpec((hdim, f), lambda i: (0, 0), **const),  # W2 (full, VMEM-resident)
                pl.BlockSpec((1, f), lambda i: (0, 0), **const),     # b2
            ],
            out_specs=pl.BlockSpec((bm, f), lambda i: (i, 0)),
        ),
        compiler_params=pltpu.CompilerParams(
            dimension_semantics=("parallel",),   # batch axis -> megacore shards on v7x
        ),
    )(x, w1c, b1f, w2c, b2f)


def init_mlp_params(key, in_features, hidden_size, dtype=jnp.float32):
    """Deterministic init matching torch.nn.Linear default (U[-1/sqrt(fan_in), +...])."""
    k1, k2, k3, k4 = jax.random.split(key, 4)
    bound1 = 1.0 / jnp.sqrt(in_features)
    bound2 = 1.0 / jnp.sqrt(hidden_size)
    # Stored as (in, out): equivalent to torch's weight.T
    w1 = jax.random.uniform(k1, (in_features, hidden_size), dtype, -bound1, bound1)
    b1 = jax.random.uniform(k2, (1, hidden_size), dtype, -bound1, bound1)
    w2 = jax.random.uniform(k3, (hidden_size, in_features), dtype, -bound2, bound2)
    b2 = jax.random.uniform(k4, (1, in_features), dtype, -bound2, bound2)
    return w1, b1, w2, b2


if __name__ == "__main__":
    # Small shapes consistent with PersonalModel: a batch of extracted backbone
    # features (embed_size) pushed through the MLP head (hidden_size default 512).
    batch = 8
    in_features = 256       # stands in for embed_size (768 for dinov2_vitb14)
    hidden_size = 512       # module default

    key = jax.random.PRNGKey(0)
    kx, kp = jax.random.split(key)
    feats = jax.random.normal(kx, (batch, in_features), jnp.float32)
    w1, b1, w2, b2 = init_mlp_params(kp, in_features, hidden_size)
    # Cast the (small) weights to the MXU compute dtype once, outside the call path.
    w1c = w1.astype(jnp.bfloat16)
    w2c = w2.astype(jnp.bfloat16)

    out = mlp_forward(feats, w1c, b1, w2c, b2)
    jax.block_until_ready(out)
    assert out.shape == (batch, in_features)
    assert out.dtype == feats.dtype

    # Full-precision reference of the module math (bf16 MXU operands -> loose tol).
    ref_f32 = jnp.maximum(feats @ w1 + b1, 0.0) @ w2 + b2 + feats
    assert jnp.allclose(out, ref_f32, atol=5e-2, rtol=5e-2)

    # Matched-precision reference (same bf16 casts, f32 accumulation) -> tight tol.
    xb = feats.astype(jnp.bfloat16)
    hb = jnp.maximum(jnp.dot(xb, w1c, preferred_element_type=jnp.float32) + b1, 0.0)
    ref_bf = (jnp.dot(hb.astype(jnp.bfloat16), w2c,
                      preferred_element_type=jnp.float32) + b2 + feats)
    assert jnp.allclose(out, ref_bf, atol=1e-3, rtol=1e-3)

    # Ragged batch: grid > 1 with a masked partial last block (no jnp.pad copy).
    feats2 = jax.random.normal(jax.random.PRNGKey(1), (50, in_features), jnp.float32)
    out2 = mlp_forward(feats2, w1c, b1, w2c, b2, block_m=64)
    jax.block_until_ready(out2)
    ref2 = jnp.maximum(feats2 @ w1 + b1, 0.0) @ w2 + b2 + feats2
    assert out2.shape == feats2.shape
    assert jnp.allclose(out2, ref2, atol=5e-2, rtol=5e-2)

    # bf16 HBM I/O path (halves x/out traffic; residual is bf16-rounded).
    feats3 = jax.random.normal(jax.random.PRNGKey(2), (48, in_features), jnp.bfloat16)
    out3 = mlp_forward(feats3, w1c, b1, w2c, b2, block_m=32)
    jax.block_until_ready(out3)
    f3 = feats3.astype(jnp.float32)
    ref3 = jnp.maximum(f3 @ w1 + b1, 0.0) @ w2 + b2 + f3
    assert out3.shape == feats3.shape
    assert out3.dtype == jnp.bfloat16
    assert jnp.allclose(out3.astype(jnp.float32), ref3, atol=1e-1, rtol=1e-1)

    print("KERNEL_OK")
</pallas_src>

<mosaic_0001>
module attributes {stable_mosaic.version = 11 : i64} {
  func.func @_mlp_kernel(%arg0: i32, %arg1: memref<8x256xf32, #tpu.memory_space<vmem>>, %arg2: memref<256x512xbf16, #tpu.memory_space<vmem>>, %arg3: memref<1x512xf32, #tpu.memory_space<vmem>>, %arg4: memref<512x256xbf16, #tpu.memory_space<vmem>>, %arg5: memref<1x256xf32, #tpu.memory_space<vmem>>, %arg6: memref<8x256xf32, #tpu.memory_space<vmem>>) attributes {dimension_semantics = [#tpu.dimension_semantics<parallel>], iteration_bounds = array<i64: 1>, scalar_prefetch = 0 : i64, scratch_operands = 0 : i64, tpu.core_type = #tpu.core_type<tc>, window_params = [{transform_indices = @transform_0, window_bounds = array<i64: 8, 256>}, {pipeline_mode = #tpu.pipeline_mode<synchronous>, transform_indices = @transform_1, window_bounds = array<i64: 256, 512>}, {pipeline_mode = #tpu.pipeline_mode<synchronous>, transform_indices = @transform_2, window_bounds = array<i64: 1, 512>}, {pipeline_mode = #tpu.pipeline_mode<synchronous>, transform_indices = @transform_3, window_bounds = array<i64: 512, 256>}, {pipeline_mode = #tpu.pipeline_mode<synchronous>, transform_indices = @transform_4, window_bounds = array<i64: 1, 256>}, {transform_indices = @transform_5, window_bounds = array<i64: 8, 256>}]} {
    %c0 = arith.constant 0 : index
    %c0_0 = arith.constant 0 : index
    %0 = vector.load %arg1[%c0, %c0_0] : memref<8x256xf32, #tpu.memory_space<vmem>>, vector<8x256xf32>
    %1 = arith.truncf %0 : vector<8x256xf32> to vector<8x256xbf16>
    %c0_1 = arith.constant 0 : index
    %c0_2 = arith.constant 0 : index
    %2 = vector.load %arg2[%c0_1, %c0_2] : memref<256x512xbf16, #tpu.memory_space<vmem>>, vector<256x512xbf16>
    %cst = arith.constant dense<0.000000e+00> : vector<8x512xf32>
    %3 = tpu.matmul %1, %2, %cst {dimension_numbers = #tpu.dot_dimension_numbers<[1], [0], [0], [1], [0, 0, 1, 1], [], []>} : vector<8x256xbf16>, vector<256x512xbf16>, vector<8x512xf32> -> vector<8x512xf32>
    %c0_3 = arith.constant 0 : index
    %c0_4 = arith.constant 0 : index
    %4 = vector.load %arg3[%c0_3, %c0_4] : memref<1x512xf32, #tpu.memory_space<vmem>>, vector<1x512xf32>
    %5 = vector.broadcast %4 : vector<1x512xf32> to vector<8x512xf32>
    %6 = arith.addf %3, %5 : vector<8x512xf32>
    %cst_5 = arith.constant 0.000000e+00 : f32
    %7 = vector.broadcast %cst_5 : f32 to vector<8x512xf32>
    %8 = arith.maximumf %6, %7 : vector<8x512xf32>
    %9 = arith.truncf %8 : vector<8x512xf32> to vector<8x512xbf16>
    %c0_6 = arith.constant 0 : index
    %c0_7 = arith.constant 0 : index
    %10 = vector.load %arg4[%c0_6, %c0_7] : memref<512x256xbf16, #tpu.memory_space<vmem>>, vector<512x256xbf16>
    %cst_8 = arith.constant dense<0.000000e+00> : vector<8x256xf32>
    %11 = tpu.matmul %9, %10, %cst_8 {dimension_numbers = #tpu.dot_dimension_numbers<[1], [0], [0], [1], [0, 0, 1, 1], [], []>} : vector<8x512xbf16>, vector<512x256xbf16>, vector<8x256xf32> -> vector<8x256xf32>
    %c0_9 = arith.constant 0 : index
    %c0_10 = arith.constant 0 : index
    %12 = vector.load %arg5[%c0_9, %c0_10] : memref<1x256xf32, #tpu.memory_space<vmem>>, vector<1x256xf32>
    %13 = vector.broadcast %12 : vector<1x256xf32> to vector<8x256xf32>
    %14 = arith.addf %11, %13 : vector<8x256xf32>
    %15 = arith.addf %14, %0 : vector<8x256xf32>
    %c0_11 = arith.constant 0 : index
    %c0_12 = arith.constant 0 : index
    %16 = vector.load %arg6[%c0_11, %c0_12] : memref<8x256xf32, #tpu.memory_space<vmem>>, vector<8x256xf32>
    tpu.vector_store %arg6[%c0_11, %c0_12], %15 {strides = array<i32>} : memref<8x256xf32, #tpu.memory_space<vmem>>, vector<8x256xf32>,
    return
  }
  func.func @transform_0(%arg0: i32) -> (i32, i32) {
    %c0_i32 = arith.constant 0 : i32
    %c0_i32_0 = arith.constant 0 : i32
    return %arg0, %c0_i32 : i32, i32
  }
  func.func @transform_1(%arg0: i32) -> (i32, i32) {
    %c0_i32 = arith.constant 0 : i32
    %c0_i32_0 = arith.constant 0 : i32
    %c0_i32_1 = arith.constant 0 : i32
    return %c0_i32, %c0_i32_0 : i32, i32
  }
  func.func @transform_2(%arg0: i32) -> (i32, i32) {
    %c0_i32 = arith.constant 0 : i32
    %c0_i32_0 = arith.constant 0 : i32
    %c0_i32_1 = arith.constant 0 : i32
    return %c0_i32, %c0_i32_0 : i32, i32
  }
  func.func @transform_3(%arg0: i32) -> (i32, i32) {
    %c0_i32 = arith.constant 0 : i32
    %c0_i32_0 = arith.constant 0 : i32
    %c0_i32_1 = arith.constant 0 : i32
    return %c0_i32, %c0_i32_0 : i32, i32
  }
  func.func @transform_4(%arg0: i32) -> (i32, i32) {
    %c0_i32 = arith.constant 0 : i32
    %c0_i32_0 = arith.constant 0 : i32
    %c0_i32_1 = arith.constant 0 : i32
    return %c0_i32, %c0_i32_0 : i32, i32
  }
  func.func @transform_5(%arg0: i32) -> (i32, i32) {
    %c0_i32 = arith.constant 0 : i32
    %c0_i32_0 = arith.constant 0 : i32
    return %arg0, %c0_i32 : i32, i32
  }
}

</mosaic_0001>

<llo_original>
// kernel: mlp_forward.1
$region0: #{mlp_forward.1}
  #allocation0 [shape = 'u32[]', space=smem, size = 0x4, offset = 0x4, fixed_abs, tag = 'smem constant byte address 0x4 - core index']
  #allocation1 [shape = 'u32[144,128]{1,0:T(1,128)}', space=vmem, size = 0x12000, scoped, tag = 'internal scratch']
  %s0 = inlined_call_operand.hbm [shape: f32[8,256], index: 0, kind: input, shape index: {}]
  %s1 = inlined_call_operand.hbm [shape: bf16[256,512], index: 1, kind: input, shape index: {}]
  %s2 = inlined_call_operand.vmem [shape: f32[1,512], index: 2, kind: input, shape index: {}]
  %s3 = inlined_call_operand.hbm [shape: bf16[512,256], index: 3, kind: input, shape index: {}]
  %s4 = inlined_call_operand.vmem [shape: f32[1,256], index: 4, kind: input, shape index: {}]
  %s5 = inlined_call_operand.hbm [shape: f32[8,256], index: 5, kind: output, shape index: {}]
  %s6 = sld [smem:[#allocation0]]
  $region42: #{mlp_forward.1} parent=0
    _
  %s8 = ssub.s32 1, %s6
  %s9 = scalar_select 0, %s8, %s6
  $region1: #{mlp_forward.1} parent=0
    #allocation2 [shape = 'u8[8192]{0}', space=vmem, size = 0x2000, scoped, tag = 'input window, operand 0, single buffered']
    #allocation3 [shape = 's32[1]{0}', space=sflag, size = 0x4, scoped, tag = 'scoped memory for mlp_forward.1']
    #allocation4 [shape = 's32[1]{0}', space=sflag, size = 0x4, scoped, tag = 'scoped memory for mlp_forward.1']
    #allocation5 [shape = 'u8[262144]{0}', space=vmem, size = 0x40000, scoped, tag = 'input window, operand 1, single buffered']
    #allocation6 [shape = 's32[1]{0}', space=sflag, size = 0x4, scoped, tag = 'scoped memory for mlp_forward.1']
    #allocation7 [shape = 'u8[262144]{0}', space=vmem, size = 0x40000, scoped, tag = 'input window, operand 3, single buffered']
    #allocation8 [shape = 'u8[8192]{0}', space=vmem, size = 0x2000, scoped, tag = 'output window, operand 0, single buffered']
    %10 = vsyncpa [#allocation3], 0
    %11 = vsyncpa [#allocation6], 0
    %12 = vsyncpa [#allocation4], 0
    // Predicated region
    $region2: #{mlp_forward.1} parent=1 // pred_check
      _
    $region3: #{mlp_forward.1} parent=1 // pred_check_branch
      %14 = sbr.rel (0) target = $region5
    $region4: #{mlp_forward.1} parent=1 // pred_region
      %s16 = ssub.s32 256, 256
      %17 = vsyncadd [#allocation3], %s16
      %s19 = sshll.u32 [#allocation2], 4
      %s20 = int_to_ptr.vmem [resolvable:$true] %s19
      %22 = dma.hbm_to_vmem [thread:$0]  %s0, 256, %s20, [#allocation3]
    $region5: #{mlp_forward.1} parent=1 // pred_fallthru
      _
    // Predicated region
    $region6: #{mlp_forward.1} parent=1 // pred_check
      _
    $region7: #{mlp_forward.1} parent=1 // pred_check_branch
      %24 = sbr.rel (0) target = $region9
    $region8: #{mlp_forward.1} parent=1 // pred_region
      %s26 = ssub.s32 8192, 8192
      %27 = vsyncadd [#allocation6], %s26
      %s28 = sshll.u32 [#allocation5], 4
      %s29 = int_to_ptr.vmem [resolvable:$true] %s28
      %34 = dma.hbm_to_vmem [thread:$0]  %s1, 8192, %s29, [#allocation6], 256, 256, 16
    $region9: #{mlp_forward.1} parent=1 // pred_fallthru
      _
    // Predicated region
    $region10: #{mlp_forward.1} parent=1 // pred_check
      _
    $region11: #{mlp_forward.1} parent=1 // pred_check_branch
      %36 = sbr.rel (0) target = $region13
    $region12: #{mlp_forward.1} parent=1 // pred_region
      _
    $region13: #{mlp_forward.1} parent=1 // pred_fallthru
      _
    // Predicated region
    $region14: #{mlp_forward.1} parent=1 // pred_check
      _
    $region15: #{mlp_forward.1} parent=1 // pred_check_branch
      %38 = sbr.rel (0) target = $region17
    $region16: #{mlp_forward.1} parent=1 // pred_region
      %s40 = ssub.s32 8192, 8192
      %41 = vsyncadd [#allocation6], %s40
      %s42 = sshll.u32 [#allocation7], 4
      %s43 = int_to_ptr.vmem [resolvable:$true] %s42
      %48 = dma.hbm_to_vmem [thread:$0]  %s3, 8192, %s43, [#allocation6], 128, 128, 8
    $region17: #{mlp_forward.1} parent=1 // pred_fallthru
      _
    // Predicated region
    $region18: #{mlp_forward.1} parent=1 // pred_check
      _
    $region19: #{mlp_forward.1} parent=1 // pred_check_branch
      %50 = sbr.rel (0) target = $region21
    $region20: #{mlp_forward.1} parent=1 // pred_region
      _
    $region21: #{mlp_forward.1} parent=1 // pred_fallthru
      _
    // Predicated region
    $region22: #{mlp_forward.1} parent=1 // pred_check
      _
    $region23: #{mlp_forward.1} parent=1 // pred_check_branch
      %52 = sbr.rel (0) target = $region25
    $region24: #{mlp_forward.1} parent=1 // pred_region
      %53 = dma.done [#allocation3], 256
    $region25: #{mlp_forward.1} parent=1 // pred_fallthru
      _
    // Predicated region
    $region26: #{mlp_forward.1} parent=1 // pred_check
      _
    $region27: #{mlp_forward.1} parent=1 // pred_check_branch
      %55 = sbr.rel (0) target = $region29
    $region28: #{mlp_forward.1} parent=1 // pred_region
      %56 = dma.done [#allocation6], 8192
    $region29: #{mlp_forward.1} parent=1 // pred_fallthru
      _
    // Predicated region
    $region30: #{mlp_forward.1} parent=1 // pred_check
      _
    $region31: #{mlp_forward.1} parent=1 // pred_check_branch
      %58 = sbr.rel (0) target = $region33
    $region32: #{mlp_forward.1} parent=1 // pred_region
      %59 = dma.done [#allocation6], 8192
    $region33: #{mlp_forward.1} parent=1 // pred_fallthru
      _
    %v60 = vld [vmem:[#allocation2] sm:$0xff]
    %v61 = vld [vmem:[#allocation2 + $0x8] sm:$0xff]
    %v62 = vpack.c.bf16 %v60, %v60
    %v63 = vpack.c.bf16 %v61, %v61
    %v64 = vld [vmem:[#allocation5] sm:$0xff]
    %v65 = vld [vmem:[#allocation5 + $0x8] sm:$0xff]
    %v66 = vld [vmem:[#allocation5 + $0x10] sm:$0xff]
    %v67 = vld [vmem:[#allocation5 + $0x18] sm:$0xff]
    %v68 = vld [vmem:[#allocation5 + $0x20] sm:$0xff]
    %v69 = vld [vmem:[#allocation5 + $0x28] sm:$0xff]
    %v70 = vld [vmem:[#allocation5 + $0x30] sm:$0xff]
    %v71 = vld [vmem:[#allocation5 + $0x38] sm:$0xff]
    %v72 = vld [vmem:[#allocation5 + $0x40] sm:$0xff]
    %v73 = vld [vmem:[#allocation5 + $0x48] sm:$0xff]
    %v74 = vld [vmem:[#allocation5 + $0x50] sm:$0xff]
    %v75 = vld [vmem:[#allocation5 + $0x58] sm:$0xff]
    %v76 = vld [vmem:[#allocation5 + $0x60] sm:$0xff]
    %v77 = vld [vmem:[#allocation5 + $0x68] sm:$0xff]
    %v78 = vld [vmem:[#allocation5 + $0x70] sm:$0xff]
    %v79 = vld [vmem:[#allocation5 + $0x78] sm:$0xff]
    %v80 = vld [vmem:[#allocation5 + $0x80] sm:$0xff]
    %v81 = vld [vmem:[#allocation5 + $0x88] sm:$0xff]
    %v82 = vld [vmem:[#allocation5 + $0x90] sm:$0xff]
    %v83 = vld [vmem:[#allocation5 + $0x98] sm:$0xff]
    %v84 = vld [vmem:[#allocation5 + $0xa0] sm:$0xff]
    %v85 = vld [vmem:[#allocation5 + $0xa8] sm:$0xff]
    %v86 = vld [vmem:[#allocation5 + $0xb0] sm:$0xff]
    %v87 = vld [vmem:[#allocation5 + $0xb8] sm:$0xff]
    %v88 = vld [vmem:[#allocation5 + $0xc0] sm:$0xff]
    %v89 = vld [vmem:[#allocation5 + $0xc8] sm:$0xff]
    %v90 = vld [vmem:[#allocation5 + $0xd0] sm:$0xff]
    %v91 = vld [vmem:[#allocation5 + $0xd8] sm:$0xff]
    %v92 = vld [vmem:[#allocation5 + $0xe0] sm:$0xff]
    %v93 = vld [vmem:[#allocation5 + $0xe8] sm:$0xff]
    %v94 = vld [vmem:[#allocation5 + $0xf0] sm:$0xff]
    %v95 = vld [vmem:[#allocation5 + $0xf8] sm:$0xff]
    %v96 = vld [vmem:[#allocation5 + $0x100] sm:$0xff]
    %v97 = vld [vmem:[#allocation5 + $0x108] sm:$0xff]
    %v98 = vld [vmem:[#allocation5 + $0x110] sm:$0xff]
    %v99 = vld [vmem:[#allocation5 + $0x118] sm:$0xff]
    %v100 = vld [vmem:[#allocation5 + $0x120] sm:$0xff]
    %v101 = vld [vmem:[#allocation5 + $0x128] sm:$0xff]
    %v102 = vld [vmem:[#allocation5 + $0x130] sm:$0xff]
    %v103 = vld [vmem:[#allocation5 + $0x138] sm:$0xff]
    %v104 = vld [vmem:[#allocation5 + $0x140] sm:$0xff]
    %v105 = vld [vmem:[#allocation5 + $0x148] sm:$0xff]
    %v106 = vld [vmem:[#allocation5 + $0x150] sm:$0xff]
    %v107 = vld [vmem:[#allocation5 + $0x158] sm:$0xff]
    %v108 = vld [vmem:[#allocation5 + $0x160] sm:$0xff]
    %v109 = vld [vmem:[#allocation5 + $0x168] sm:$0xff]
    %v110 = vld [vmem:[#allocation5 + $0x170] sm:$0xff]
    %v111 = vld [vmem:[#allocation5 + $0x178] sm:$0xff]
    %v112 = vld [vmem:[#allocation5 + $0x180] sm:$0xff]
    %v113 = vld [vmem:[#allocation5 + $0x188] sm:$0xff]
    %v114 = vld [vmem:[#allocation5 + $0x190] sm:$0xff]
    %v115 = vld [vmem:[#allocation5 + $0x198] sm:$0xff]
    %v116 = vld [vmem:[#allocation5 + $0x1a0] sm:$0xff]
    %v117 = vld [vmem:[#allocation5 + $0x1a8] sm:$0xff]
    %v118 = vld [vmem:[#allocation5 + $0x1b0] sm:$0xff]
    %v119 = vld [vmem:[#allocation5 + $0x1b8] sm:$0xff]
    %v120 = vld [vmem:[#allocation5 + $0x1c0] sm:$0xff]
    %v121 = vld [vmem:[#allocation5 + $0x1c8] sm:$0xff]
    %v122 = vld [vmem:[#allocation5 + $0x1d0] sm:$0xff]
    %v123 = vld [vmem:[#allocation5 + $0x1d8] sm:$0xff]
    %v124 = vld [vmem:[#allocation5 + $0x1e0] sm:$0xff]
    %v125 = vld [vmem:[#allocation5 + $0x1e8] sm:$0xff]
    %v126 = vld [vmem:[#allocation5 + $0x1f0] sm:$0xff]
    %v127 = vld [vmem:[#allocation5 + $0x1f8] sm:$0xff]
    %v128 = vld [vmem:[%s2] sm:$0xf]
    %v130 = vlaneseq
    %v131 = vshrl.u32 %v130, 7
    %v132 = vsub.s32 0, %v131
    %v133 = vrot.slane %v128, %v132
    %v134 = vlaneseq
    %v135 = vshrl.u32 %v134, 7
    %v136 = vsub.s32 1, %v135
    %v137 = vrot.slane %v128, %v136
    %v138 = vlaneseq
    %v139 = vshrl.u32 %v138, 7
    %v140 = vsub.s32 2, %v139
    %v141 = vrot.slane %v128, %v140
    %v142 = vlaneseq
    %v143 = vshrl.u32 %v142, 7
    %v144 = vsub.s32 3, %v143
    %v145 = vrot.slane %v128, %v144
    %v214 = vunpack.c.l.b16 %v64
    %v215 = vunpack.c.h.b16 %v64
    %v216 = vunpack.c.l.b16 %v65
    %v217 = vunpack.c.h.b16 %v65
    %v218 = vunpack.c.l.b16 %v66
    %v219 = vunpack.c.h.b16 %v66
    %v220 = vunpack.c.l.b16 %v67
    %v221 = vunpack.c.h.b16 %v67
    %v222 = vunpack.c.l.b16 %v68
    %v223 = vunpack.c.h.b16 %v68
    %v224 = vunpack.c.l.b16 %v69
    %v225 = vunpack.c.h.b16 %v69
    %v226 = vunpack.c.l.b16 %v70
    %v227 = vunpack.c.h.b16 %v70
    %v228 = vunpack.c.l.b16 %v71
    %v229 = vunpack.c.h.b16 %v71
    %v230 = vunpack.c.l.b16 %v72
    %v231 = vunpack.c.h.b16 %v72
    %v232 = vunpack.c.l.b16 %v73
    %v233 = vunpack.c.h.b16 %v73
    %v234 = vunpack.c.l.b16 %v74
    %v235 = vunpack.c.h.b16 %v74
    %v236 = vunpack.c.l.b16 %v75
    %v237 = vunpack.c.h.b16 %v75
    %v238 = vunpack.c.l.b16 %v76
    %v239 = vunpack.c.h.b16 %v76
    %v240 = vunpack.c.l.b16 %v77
    %v241 = vunpack.c.h.b16 %v77
    %v242 = vunpack.c.l.b16 %v78
    %v243 = vunpack.c.h.b16 %v78
    %v244 = vunpack.c.l.b16 %v79
    %v245 = vunpack.c.h.b16 %v79
    %v246 = vunpack.c.l.b16 %v80
    %v247 = vunpack.c.h.b16 %v80
    %v248 = vunpack.c.l.b16 %v81
    %v249 = vunpack.c.h.b16 %v81
    %v250 = vunpack.c.l.b16 %v82
    %v251 = vunpack.c.h.b16 %v82
    %v252 = vunpack.c.l.b16 %v83
    %v253 = vunpack.c.h.b16 %v83
    %v254 = vunpack.c.l.b16 %v84
    %v255 = vunpack.c.h.b16 %v84
    %v256 = vunpack.c.l.b16 %v85
    %v257 = vunpack.c.h.b16 %v85
    %v258 = vunpack.c.l.b16 %v86
    %v259 = vunpack.c.h.b16 %v86
    %v260 = vunpack.c.l.b16 %v87
    %v261 = vunpack.c.h.b16 %v87
    %v262 = vunpack.c.l.b16 %v88
    %v263 = vunpack.c.h.b16 %v88
    %v264 = vunpack.c.l.b16 %v89
    %v265 = vunpack.c.h.b16 %v89
    %v266 = vunpack.c.l.b16 %v90
    %v267 = vunpack.c.h.b16 %v90
    %v268 = vunpack.c.l.b16 %v91
    %v269 = vunpack.c.h.b16 %v91
    %v270 = vunpack.c.l.b16 %v92
    %v271 = vunpack.c.h.b16 %v92
    %v272 = vunpack.c.l.b16 %v93
    %v273 = vunpack.c.h.b16 %v93
    %v274 = vunpack.c.l.b16 %v94
    %v275 = vunpack.c.h.b16 %v94
    %v276 = vunpack.c.l.b16 %v95
    %v277 = vunpack.c.h.b16 %v95
    %v278 = vunpack.c.l.b16 %v96
    %v279 = vunpack.c.h.b16 %v96
    %v280 = vunpack.c.l.b16 %v97
    %v281 = vunpack.c.h.b16 %v97
    %v282 = vunpack.c.l.b16 %v98
    %v283 = vunpack.c.h.b16 %v98
    %v284 = vunpack.c.l.b16 %v99
    %v285 = vunpack.c.h.b16 %v99
    %v286 = vunpack.c.l.b16 %v100
    %v287 = vunpack.c.h.b16 %v100
    %v288 = vunpack.c.l.b16 %v101
    %v289 = vunpack.c.h.b16 %v101
    %v290 = vunpack.c.l.b16 %v102
    %v291 = vunpack.c.h.b16 %v102
    %v292 = vunpack.c.l.b16 %v103
    %v293 = vunpack.c.h.b16 %v103
    %v294 = vunpack.c.l.b16 %v104
    %v295 = vunpack.c.h.b16 %v104
    %v296 = vunpack.c.l.b16 %v105
    %v297 = vunpack.c.h.b16 %v105
    %v298 = vunpack.c.l.b16 %v106
    %v299 = vunpack.c.h.b16 %v106
    %v300 = vunpack.c.l.b16 %v107
    %v301 = vunpack.c.h.b16 %v107
    %v302 = vunpack.c.l.b16 %v108
    %v303 = vunpack.c.h.b16 %v108
    %v304 = vunpack.c.l.b16 %v109
    %v305 = vunpack.c.h.b16 %v109
    %v306 = vunpack.c.l.b16 %v110
    %v307 = vunpack.c.h.b16 %v110
    %v308 = vunpack.c.l.b16 %v111
    %v309 = vunpack.c.h.b16 %v111
    %v310 = vunpack.c.l.b16 %v112
    %v311 = vunpack.c.h.b16 %v112
    %v312 = vunpack.c.l.b16 %v113
    %v313 = vunpack.c.h.b16 %v113
    %v314 = vunpack.c.l.b16 %v114
    %v315 = vunpack.c.h.b16 %v114
    %v316 = vunpack.c.l.b16 %v115
    %v317 = vunpack.c.h.b16 %v115
    %v318 = vunpack.c.l.b16 %v116
    %v319 = vunpack.c.h.b16 %v116
    %v320 = vunpack.c.l.b16 %v117
    %v321 = vunpack.c.h.b16 %v117
    %v322 = vunpack.c.l.b16 %v118
    %v323 = vunpack.c.h.b16 %v118
    %v324 = vunpack.c.l.b16 %v119
    %v325 = vunpack.c.h.b16 %v119
    %v326 = vunpack.c.l.b16 %v120
    %v327 = vunpack.c.h.b16 %v120
    %v328 = vunpack.c.l.b16 %v121
    %v329 = vunpack.c.h.b16 %v121
    %v330 = vunpack.c.l.b16 %v122
    %v331 = vunpack.c.h.b16 %v122
    %v332 = vunpack.c.l.b16 %v123
    %v333 = vunpack.c.h.b16 %v123
    %v334 = vunpack.c.l.b16 %v124
    %v335 = vunpack.c.h.b16 %v124
    %v336 = vunpack.c.l.b16 %v125
    %v337 = vunpack.c.h.b16 %v125
    %v338 = vunpack.c.l.b16 %v126
    %v339 = vunpack.c.h.b16 %v126
    %v340 = vunpack.c.l.b16 %v127
    %v341 = vunpack.c.h.b16 %v127
    %v342 = vpack.c.b16 %v218, %v214
    %v343 = vpack.c.b16 %v219, %v215
    %v344 = vpack.c.b16 %v220, %v216
    %v345 = vpack.c.b16 %v221, %v217
    %v346 = vpack.c.b16 %v226, %v222
    %v347 = vpack.c.b16 %v227, %v223
    %v348 = vpack.c.b16 %v228, %v224
    %v349 = vpack.c.b16 %v229, %v225
    %v350 = vpack.c.b16 %v234, %v230
    %v351 = vpack.c.b16 %v235, %v231
    %v352 = vpack.c.b16 %v236, %v232
    %v353 = vpack.c.b16 %v237, %v233
    %v354 = vpack.c.b16 %v242, %v238
    %v355 = vpack.c.b16 %v243, %v239
    %v356 = vpack.c.b16 %v244, %v240
    %v357 = vpack.c.b16 %v245, %v241
    %v358 = vpack.c.b16 %v250, %v246
    %v359 = vpack.c.b16 %v251, %v247
    %v360 = vpack.c.b16 %v252, %v248
    %v361 = vpack.c.b16 %v253, %v249
    %v362 = vpack.c.b16 %v258, %v254
    %v363 = vpack.c.b16 %v259, %v255
    %v364 = vpack.c.b16 %v260, %v256
    %v365 = vpack.c.b16 %v261, %v257
    %v366 = vpack.c.b16 %v266, %v262
    %v367 = vpack.c.b16 %v267, %v263
    %v368 = vpack.c.b16 %v268, %v264
    %v369 = vpack.c.b16 %v269, %v265
    %v370 = vpack.c.b16 %v274, %v270
    %v371 = vpack.c.b16 %v275, %v271
    %v372 = vpack.c.b16 %v276, %v272
    %v373 = vpack.c.b16 %v277, %v273
    %v374 = vpack.c.b16 %v282, %v278
    %v375 = vpack.c.b16 %v283, %v279
    %v376 = vpack.c.b16 %v284, %v280
    %v377 = vpack.c.b16 %v285, %v281
    %v378 = vpack.c.b16 %v290, %v286
    %v379 = vpack.c.b16 %v291, %v287
    %v380 = vpack.c.b16 %v292, %v288
    %v381 = vpack.c.b16 %v293, %v289
    %v382 = vpack.c.b16 %v298, %v294
    %v383 = vpack.c.b16 %v299, %v295
    %v384 = vpack.c.b16 %v300, %v296
    %v385 = vpack.c.b16 %v301, %v297
    %v386 = vpack.c.b16 %v306, %v302
    %v387 = vpack.c.b16 %v307, %v303
    %v388 = vpack.c.b16 %v308, %v304
    %v389 = vpack.c.b16 %v309, %v305
    %v390 = vpack.c.b16 %v314, %v310
    %v391 = vpack.c.b16 %v315, %v311
    %v392 = vpack.c.b16 %v316, %v312
    %v393 = vpack.c.b16 %v317, %v313
    %v394 = vpack.c.b16 %v322, %v318
    %v395 = vpack.c.b16 %v323, %v319
    %v396 = vpack.c.b16 %v324, %v320
    %v397 = vpack.c.b16 %v325, %v321
    %v398 = vpack.c.b16 %v330, %v326
    %v399 = vpack.c.b16 %v331, %v327
    %v400 = vpack.c.b16 %v332, %v328
    %v401 = vpack.c.b16 %v333, %v329
    %v402 = vpack.c.b16 %v338, %v334
    %v403 = vpack.c.b16 %v339, %v335
    %v404 = vpack.c.b16 %v340, %v336
    %v405 = vpack.c.b16 %v341, %v337
    %470 = vmatprep.subr.bf16.mxu0 %v343
    %471 = vmatpush1.bf16.msra.mxu0 %v342
    %472 = vmatprep.subr.bf16.mxu0 %v347
    %473 = vmatpush1.bf16.msra.mxu0 %v346
    %474 = vmatprep.subr.bf16.mxu0 %v351
    %475 = vmatpush1.bf16.msra.mxu0 %v350
    %476 = vmatprep.subr.bf16.mxu0 %v355
    %477 = vmatpush1.bf16.msra.mxu0 %v354
    %478 = vmatprep.subr.bf16.mxu0 %v359
    %479 = vmatpush1.bf16.msra.mxu0 %v358
    %480 = vmatprep.subr.bf16.mxu0 %v363
    %481 = vmatpush1.bf16.msra.mxu0 %v362
    %482 = vmatprep.subr.bf16.mxu0 %v367
    %483 = vmatpush1.bf16.msra.mxu0 %v366
    %484 = vmatprep.subr.bf16.mxu0 %v371
    %485 = vmatpush1.bf16.msra.mxu0 %v370
    %486 = vmatprep.subr.bf16.mxu0 %v375
    %487 = vmatpush1.bf16.msra.mxu0 %v374
    %488 = vmatprep.subr.bf16.mxu0 %v379
    %489 = vmatpush1.bf16.msra.mxu0 %v378
    %490 = vmatprep.subr.bf16.mxu0 %v383
    %491 = vmatpush1.bf16.msra.mxu0 %v382
    %492 = vmatprep.subr.bf16.mxu0 %v387
    %493 = vmatpush1.bf16.msra.mxu0 %v386
    %494 = vmatprep.subr.bf16.mxu0 %v391
    %495 = vmatpush1.bf16.msra.mxu0 %v390
    %496 = vmatprep.subr.bf16.mxu0 %v395
    %497 = vmatpush1.bf16.msra.mxu0 %v394
    %498 = vmatprep.subr.bf16.mxu0 %v399
    %499 = vmatpush1.bf16.msra.mxu0 %v398
    %500 = vmatprep.subr.bf16.mxu0 %v403
    %501 = vmatpush1.bf16.msra.mxu0 %v402
    %502 = vmatprep.mubr.bf16.mxu0 %v63
    %503 = vmatmul.mubr.bf16.gmra.mrb[0].mxu0 %v62
    %v504 = vpop.f32.mrb[0].mxu0
    %v505 = vadd.f32 %v133, %v504
    %v506 = vpop.f32.mrb[0].mxu0
    %v507 = vadd.f32 %v137, %v506
    %v508 = vpop.f32.mrb[0].mxu0
    %v509 = vpop.f32.mrb[0].mxu0
    %510 = vdwg.mxu0
    %511 = vmatprep.subr.bf16.mxu0 %v345
    %512 = vmatpush1.bf16.msra.mxu0 %v344
    %513 = vmatprep.subr.bf16.mxu0 %v349
    %514 = vmatpush1.bf16.msra.mxu0 %v348
    %515 = vmatprep.subr.bf16.mxu0 %v353
    %516 = vmatpush1.bf16.msra.mxu0 %v352
    %517 = vmatprep.subr.bf16.mxu0 %v357
    %518 = vmatpush1.bf16.msra.mxu0 %v356
    %519 = vmatprep.subr.bf16.mxu0 %v361
    %520 = vmatpush1.bf16.msra.mxu0 %v360
    %521 = vmatprep.subr.bf16.mxu0 %v365
    %522 = vmatpush1.bf16.msra.mxu0 %v364
    %523 = vmatprep.subr.bf16.mxu0 %v369
    %524 = vmatpush1.bf16.msra.mxu0 %v368
    %525 = vmatprep.subr.bf16.mxu0 %v373
    %526 = vmatpush1.bf16.msra.mxu0 %v372
    %527 = vmatprep.subr.bf16.mxu0 %v377
    %528 = vmatpush1.bf16.msra.mxu0 %v376
    %529 = vmatprep.subr.bf16.mxu0 %v381
    %530 = vmatpush1.bf16.msra.mxu0 %v380
    %531 = vmatprep.subr.bf16.mxu0 %v385
    %532 = vmatpush1.bf16.msra.mxu0 %v384
    %533 = vmatprep.subr.bf16.mxu0 %v389
    %534 = vmatpush1.bf16.msra.mxu0 %v388
    %535 = vmatprep.subr.bf16.mxu0 %v393
    %536 = vmatpush1.bf16.msra.mxu0 %v392
    %537 = vmatprep.subr.bf16.mxu0 %v397
    %538 = vmatpush1.bf16.msra.mxu0 %v396
    %539 = vmatprep.subr.bf16.mxu0 %v401
    %540 = vmatpush1.bf16.msra.mxu0 %v400
    %541 = vmatprep.subr.bf16.mxu0 %v405
    %542 = vmatpush1.bf16.msra.mxu0 %v404
    %543 = vmatprep.mubr.bf16.mxu0 %v63
    %544 = vmatmul.mubr.bf16.gmra.mrb[0].mxu0 %v62
    %v545 = vpop.f32.mrb[0].mxu0
    %v546 = vadd.f32 %v141, %v545
    %v547 = vpop.f32.mrb[0].mxu0
    %v548 = vadd.f32 %v145, %v547
    %v549 = vpop.f32.mrb[0].mxu0
    %v550 = vpop.f32.mrb[0].mxu0
    %551 = vdwg.mxu0
    %v552 = vmax.f32 %v505, 0.0
    %v553 = vmax.f32 %v507, 0.0
    %v554 = vmax.f32 %v546, 0.0
    %v555 = vmax.f32 %v548, 0.0
    %v556 = vpack.c.bf16 %v552, %v552
    %v557 = vpack.c.bf16 %v553, %v553
    %v558 = vpack.c.bf16 %v554, %v554
    %v559 = vpack.c.bf16 %v555, %v555
    %v560 = vld [vmem:[#allocation7] sm:$0xff]
    %v561 = vld [vmem:[#allocation7 + $0x8] sm:$0xff]
    %v562 = vld [vmem:[#allocation7 + $0x10] sm:$0xff]
    %v563 = vld [vmem:[#allocation7 + $0x18] sm:$0xff]
    %v564 = vld [vmem:[#allocation7 + $0x20] sm:$0xff]
    %v565 = vld [vmem:[#allocation7 + $0x28] sm:$0xff]
    %v566 = vld [vmem:[#allocation7 + $0x30] sm:$0xff]
    %v567 = vld [vmem:[#allocation7 + $0x38] sm:$0xff]
    %v568 = vld [vmem:[#allocation7 + $0x40] sm:$0xff]
    %v569 = vld [vmem:[#allocation7 + $0x48] sm:$0xff]
    %v570 = vld [vmem:[#allocation7 + $0x50] sm:$0xff]
    %v571 = vld [vmem:[#allocation7 + $0x58] sm:$0xff]
    %v572 = vld [vmem:[#allocation7 + $0x60] sm:$0xff]
    %v573 = vld [vmem:[#allocation7 + $0x68] sm:$0xff]
    %v574 = vld [vmem:[#allocation7 + $0x70] sm:$0xff]
    %v575 = vld [vmem:[#allocation7 + $0x78] sm:$0xff]
    %v576 = vld [vmem:[#allocation7 + $0x80] sm:$0xff]
    %v577 = vld [vmem:[#allocation7 + $0x88] sm:$0xff]
    %v578 = vld [vmem:[#allocation7 + $0x90] sm:$0xff]
    %v579 = vld [vmem:[#allocation7 + $0x98] sm:$0xff]
    %v580 = vld [vmem:[#allocation7 + $0xa0] sm:$0xff]
    %v581 = vld [vmem:[#allocation7 + $0xa8] sm:$0xff]
    %v582 = vld [vmem:[#allocation7 + $0xb0] sm:$0xff]
    %v583 = vld [vmem:[#allocation7 + $0xb8] sm:$0xff]
    %v584 = vld [vmem:[#allocation7 + $0xc0] sm:$0xff]
    %v585 = vld [vmem:[#allocation7 + $0xc8] sm:$0xff]
    %v586 = vld [vmem:[#allocation7 + $0xd0] sm:$0xff]
    %v587 = vld [vmem:[#allocation7 + $0xd8] sm:$0xff]
    %v588 = vld [vmem:[#allocation7 + $0xe0] sm:$0xff]
    %v589 = vld [vmem:[#allocation7 + $0xe8] sm:$0xff]
    %v590 = vld [vmem:[#allocation7 + $0xf0] sm:$0xff]
    %v591 = vld [vmem:[#allocation7 + $0xf8] sm:$0xff]
    %v592 = vld [vmem:[#allocation7 + $0x100] sm:$0xff]
    %v593 = vld [vmem:[#allocation7 + $0x108] sm:$0xff]
    %v594 = vld [vmem:[#allocation7 + $0x110] sm:$0xff]
    %v595 = vld [vmem:[#allocation7 + $0x118] sm:$0xff]
    %v596 = vld [vmem:[#allocation7 + $0x120] sm:$0xff]
    %v597 = vld [vmem:[#allocation7 + $0x128] sm:$0xff]
    %v598 = vld [vmem:[#allocation7 + $0x130] sm:$0xff]
    %v599 = vld [vmem:[#allocation7 + $0x138] sm:$0xff]
    %v600 = vld [vmem:[#allocation7 + $0x140] sm:$0xff]
    %v601 = vld [vmem:[#allocation7 + $0x148] sm:$0xff]
    %v602 = vld [vmem:[#allocation7 + $0x150] sm:$0xff]
    %v603 = vld [vmem:[#allocation7 + $0x158] sm:$0xff]
    %v604 = vld [vmem:[#allocation7 + $0x160] sm:$0xff]
    %v605 = vld [vmem:[#allocation7 + $0x168] sm:$0xff]
    %v606 = vld [vmem:[#allocation7 + $0x170] sm:$0xff]
    %v607 = vld [vmem:[#allocation7 + $0x178] sm:$0xff]
    %v608 = vld [vmem:[#allocation7 + $0x180] sm:$0xff]
    %v609 = vld [vmem:[#allocation7 + $0x188] sm:$0xff]
    %v610 = vld [vmem:[#allocation7 + $0x190] sm:$0xff]
    %v611 = vld [vmem:[#allocation7 + $0x198] sm:$0xff]
    %v612 = vld [vmem:[#allocation7 + $0x1a0] sm:$0xff]
    %v613 = vld [vmem:[#allocation7 + $0x1a8] sm:$0xff]
    %v614 = vld [vmem:[#allocation7 + $0x1b0] sm:$0xff]
    %v615 = vld [vmem:[#allocation7 + $0x1b8] sm:$0xff]
    %v616 = vld [vmem:[#allocation7 + $0x1c0] sm:$0xff]
    %v617 = vld [vmem:[#allocation7 + $0x1c8] sm:$0xff]
    %v618 = vld [vmem:[#allocation7 + $0x1d0] sm:$0xff]
    %v619 = vld [vmem:[#allocation7 + $0x1d8] sm:$0xff]
    %v620 = vld [vmem:[#allocation7 + $0x1e0] sm:$0xff]
    %v621 = vld [vmem:[#allocation7 + $0x1e8] sm:$0xff]
    %v622 = vld [vmem:[#allocation7 + $0x1f0] sm:$0xff]
    %v623 = vld [vmem:[#allocation7 + $0x1f8] sm:$0xff]
    %v624 = vld [vmem:[%s4] sm:$0x3]
    %v626 = vlaneseq
    %v627 = vshrl.u32 %v626, 7
    %v628 = vsub.s32 0, %v627
    %v629 = vrot.slane %v624, %v628
    %v630 = vlaneseq
    %v631 = vshrl.u32 %v630, 7
    %v632 = vsub.s32 1, %v631
    %v633 = vrot.slane %v624, %v632
    %v700 = vunpack.c.l.b16 %v560
    %v701 = vunpack.c.h.b16 %v560
    %v702 = vunpack.c.l.b16 %v561
    %v703 = vunpack.c.h.b16 %v561
    %v704 = vunpack.c.l.b16 %v562
    %v705 = vunpack.c.h.b16 %v562
    %v706 = vunpack.c.l.b16 %v563
    %v707 = vunpack.c.h.b16 %v563
    %v708 = vunpack.c.l.b16 %v564
    %v709 = vunpack.c.h.b16 %v564
    %v710 = vunpack.c.l.b16 %v565
    %v711 = vunpack.c.h.b16 %v565
    %v712 = vunpack.c.l.b16 %v566
    %v713 = vunpack.c.h.b16 %v566
    %v714 = vunpack.c.l.b16 %v567
    %v715 = vunpack.c.h.b16 %v567
    %v716 = vunpack.c.l.b16 %v568
    %v717 = vunpack.c.h.b16 %v568
    %v718 = vunpack.c.l.b16 %v569
    %v719 = vunpack.c.h.b16 %v569
    %v720 = vunpack.c.l.b16 %v570
    %v721 = vunpack.c.h.b16 %v570
    %v722 = vunpack.c.l.b16 %v571
    %v723 = vunpack.c.h.b16 %v571
    %v724 = vunpack.c.l.b16 %v572
    %v725 = vunpack.c.h.b16 %v572
    %v726 = vunpack.c.l.b16 %v573
    %v727 = vunpack.c.h.b16 %v573
    %v728 = vunpack.c.l.b16 %v574
    %v729 = vunpack.c.h.b16 %v574
    %v730 = vunpack.c.l.b16 %v575
    %v731 = vunpack.c.h.b16 %v575
    %v732 = vunpack.c.l.b16 %v576
    %v733 = vunpack.c.h.b16 %v576
    %v734 = vunpack.c.l.b16 %v577
    %v735 = vunpack.c.h.b16 %v577
    %v736 = vunpack.c.l.b16 %v578
    %v737 = vunpack.c.h.b16 %v578
    %v738 = vunpack.c.l.b16 %v579
    %v739 = vunpack.c.h.b16 %v579
    %v740 = vunpack.c.l.b16 %v580
    %v741 = vunpack.c.h.b16 %v580
    %v742 = vunpack.c.l.b16 %v581
    %v743 = vunpack.c.h.b16 %v581
    %v744 = vunpack.c.l.b16 %v582
    %v745 = vunpack.c.h.b16 %v582
    %v746 = vunpack.c.l.b16 %v583
    %v747 = vunpack.c.h.b16 %v583
    %v748 = vunpack.c.l.b16 %v584
    %v749 = vunpack.c.h.b16 %v584
    %v750 = vunpack.c.l.b16 %v585
    %v751 = vunpack.c.h.b16 %v585
    %v752 = vunpack.c.l.b16 %v586
    %v753 = vunpack.c.h.b16 %v586
    %v754 = vunpack.c.l.b16 %v587
    %v755 = vunpack.c.h.b16 %v587
    %v756 = vunpack.c.l.b16 %v588
    %v757 = vunpack.c.h.b16 %v588
    %v758 = vunpack.c.l.b16 %v589
    %v759 = vunpack.c.h.b16 %v589
    %v760 = vunpack.c.l.b16 %v590
    %v761 = vunpack.c.h.b16 %v590
    %v762 = vunpack.c.l.b16 %v591
    %v763 = vunpack.c.h.b16 %v591
    %v764 = vunpack.c.l.b16 %v592
    %v765 = vunpack.c.h.b16 %v592
    %v766 = vunpack.c.l.b16 %v593
    %v767 = vunpack.c.h.b16 %v593
    %v768 = vunpack.c.l.b16 %v594
    %v769 = vunpack.c.h.b16 %v594
    %v770 = vunpack.c.l.b16 %v595
    %v771 = vunpack.c.h.b16 %v595
    %v772 = vunpack.c.l.b16 %v596
    %v773 = vunpack.c.h.b16 %v596
    %v774 = vunpack.c.l.b16 %v597
    %v775 = vunpack.c.h.b16 %v597
    %v776 = vunpack.c.l.b16 %v598
    %v777 = vunpack.c.h.b16 %v598
    %v778 = vunpack.c.l.b16 %v599
    %v779 = vunpack.c.h.b16 %v599
    %v780 = vunpack.c.l.b16 %v600
    %v781 = vunpack.c.h.b16 %v600
    %v782 = vunpack.c.l.b16 %v601
    %v783 = vunpack.c.h.b16 %v601
    %v784 = vunpack.c.l.b16 %v602
    %v785 = vunpack.c.h.b16 %v602
    %v786 = vunpack.c.l.b16 %v603
    %v787 = vunpack.c.h.b16 %v603
    %v788 = vunpack.c.l.b16 %v604
    %v789 = vunpack.c.h.b16 %v604
    %v790 = vunpack.c.l.b16 %v605
    %v791 = vunpack.c.h.b16 %v605
    %v792 = vunpack.c.l.b16 %v606
    %v793 = vunpack.c.h.b16 %v606
    %v794 = vunpack.c.l.b16 %v607
    %v795 = vunpack.c.h.b16 %v607
    %v796 = vunpack.c.l.b16 %v608
    %v797 = vunpack.c.h.b16 %v608
    %v798 = vunpack.c.l.b16 %v609
    %v799 = vunpack.c.h.b16 %v609
    %v800 = vunpack.c.l.b16 %v610
    %v801 = vunpack.c.h.b16 %v610
    %v802 = vunpack.c.l.b16 %v611
    %v803 = vunpack.c.h.b16 %v611
    %v804 = vunpack.c.l.b16 %v612
    %v805 = vunpack.c.h.b16 %v612
    %v806 = vunpack.c.l.b16 %v613
    %v807 = vunpack.c.h.b16 %v613
    %v808 = vunpack.c.l.b16 %v614
    %v809 = vunpack.c.h.b16 %v614
    %v810 = vunpack.c.l.b16 %v615
    %v811 = vunpack.c.h.b16 %v615
    %v812 = vunpack.c.l.b16 %v616
    %v813 = vunpack.c.h.b16 %v616
    %v814 = vunpack.c.l.b16 %v617
    %v815 = vunpack.c.h.b16 %v617
    %v816 = vunpack.c.l.b16 %v618
    %v817 = vunpack.c.h.b16 %v618
    %v818 = vunpack.c.l.b16 %v619
    %v819 = vunpack.c.h.b16 %v619
    %v820 = vunpack.c.l.b16 %v620
    %v821 = vunpack.c.h.b16 %v620
    %v822 = vunpack.c.l.b16 %v621
    %v823 = vunpack.c.h.b16 %v621
    %v824 = vunpack.c.l.b16 %v622
    %v825 = vunpack.c.h.b16 %v622
    %v826 = vunpack.c.l.b16 %v623
    %v827 = vunpack.c.h.b16 %v623
    %v828 = vpack.c.b16 %v702, %v700
    %v829 = vpack.c.b16 %v703, %v701
    %v830 = vpack.c.b16 %v706, %v704
    %v831 = vpack.c.b16 %v707, %v705
    %v832 = vpack.c.b16 %v710, %v708
    %v833 = vpack.c.b16 %v711, %v709
    %v834 = vpack.c.b16 %v714, %v712
    %v835 = vpack.c.b16 %v715, %v713
    %v836 = vpack.c.b16 %v718, %v716
    %v837 = vpack.c.b16 %v719, %v717
    %v838 = vpack.c.b16 %v722, %v720
    %v839 = vpack.c.b16 %v723, %v721
    %v840 = vpack.c.b16 %v726, %v724
    %v841 = vpack.c.b16 %v727, %v725
    %v842 = vpack.c.b16 %v730, %v728
    %v843 = vpack.c.b16 %v731, %v729
    %v844 = vpack.c.b16 %v734, %v732
    %v845 = vpack.c.b16 %v735, %v733
    %v846 = vpack.c.b16 %v738, %v736
    %v847 = vpack.c.b16 %v739, %v737
    %v848 = vpack.c.b16 %v742, %v740
    %v849 = vpack.c.b16 %v743, %v741
    %v850 = vpack.c.b16 %v746, %v744
    %v851 = vpack.c.b16 %v747, %v745
    %v852 = vpack.c.b16 %v750, %v748
    %v853 = vpack.c.b16 %v751, %v749
    %v854 = vpack.c.b16 %v754, %v752
    %v855 = vpack.c.b16 %v755, %v753
    %v856 = vpack.c.b16 %v758, %v756
    %v857 = vpack.c.b16 %v759, %v757
    %v858 = vpack.c.b16 %v762, %v760
    %v859 = vpack.c.b16 %v763, %v761
    %v860 = vpack.c.b16 %v766, %v764
    %v861 = vpack.c.b16 %v767, %v765
    %v862 = vpack.c.b16 %v770, %v768
    %v863 = vpack.c.b16 %v771, %v769
    %v864 = vpack.c.b16 %v774, %v772
    %v865 = vpack.c.b16 %v775, %v773
    %v866 = vpack.c.b16 %v778, %v776
    %v867 = vpack.c.b16 %v779, %v777
    %v868 = vpack.c.b16 %v782, %v780
    %v869 = vpack.c.b16 %v783, %v781
    %v870 = vpack.c.b16 %v786, %v784
    %v871 = vpack.c.b16 %v787, %v785
    %v872 = vpack.c.b16 %v790, %v788
    %v873 = vpack.c.b16 %v791, %v789
    %v874 = vpack.c.b16 %v794, %v792
    %v875 = vpack.c.b16 %v795, %v793
    %v876 = vpack.c.b16 %v798, %v796
    %v877 = vpack.c.b16 %v799, %v797
    %v878 = vpack.c.b16 %v802, %v800
    %v879 = vpack.c.b16 %v803, %v801
    %v880 = vpack.c.b16 %v806, %v804
    %v881 = vpack.c.b16 %v807, %v805
    %v882 = vpack.c.b16 %v810, %v808
    %v883 = vpack.c.b16 %v811, %v809
    %v884 = vpack.c.b16 %v814, %v812
    %v885 = vpack.c.b16 %v815, %v813
    %v886 = vpack.c.b16 %v818, %v816
    %v887 = vpack.c.b16 %v819, %v817
    %v888 = vpack.c.b16 %v822, %v820
    %v889 = vpack.c.b16 %v823, %v821
    %v890 = vpack.c.b16 %v826, %v824
    %v891 = vpack.c.b16 %v827, %v825
    %956 = vmatprep.subr.bf16.mxu0 %v829
    %957 = vmatpush1.bf16.msra.mxu0 %v828
    %958 = vmatprep.subr.bf16.mxu0 %v831
    %959 = vmatpush1.bf16.msra.mxu0 %v830
    %960 = vmatprep.subr.bf16.mxu0 %v833
    %961 = vmatpush1.bf16.msra.mxu0 %v832
    %962 = vmatprep.subr.bf16.mxu0 %v835
    %963 = vmatpush1.bf16.msra.mxu0 %v834
    %964 = vmatprep.subr.bf16.mxu0 %v837
    %965 = vmatpush1.bf16.msra.mxu0 %v836
    %966 = vmatprep.subr.bf16.mxu0 %v839
    %967 = vmatpush1.bf16.msra.mxu0 %v838
    %968 = vmatprep.subr.bf16.mxu0 %v841
    %969 = vmatpush1.bf16.msra.mxu0 %v840
    %970 = vmatprep.subr.bf16.mxu0 %v843
    %971 = vmatpush1.bf16.msra.mxu0 %v842
    %972 = vmatprep.subr.bf16.mxu0 %v845
    %973 = vmatpush1.bf16.msra.mxu0 %v844
    %974 = vmatprep.subr.bf16.mxu0 %v847
    %975 = vmatpush1.bf16.msra.mxu0 %v846
    %976 = vmatprep.subr.bf16.mxu0 %v849
    %977 = vmatpush1.bf16.msra.mxu0 %v848
    %978 = vmatprep.subr.bf16.mxu0 %v851
    %979 = vmatpush1.bf16.msra.mxu0 %v850
    %980 = vmatprep.subr.bf16.mxu0 %v853
    %981 = vmatpush1.bf16.msra.mxu0 %v852
    %982 = vmatprep.subr.bf16.mxu0 %v855
    %983 = vmatpush1.bf16.msra.mxu0 %v854
    %984 = vmatprep.subr.bf16.mxu0 %v857
    %985 = vmatpush1.bf16.msra.mxu0 %v856
    %986 = vmatprep.subr.bf16.mxu0 %v859
    %987 = vmatpush1.bf16.msra.mxu0 %v858
    %988 = vmatprep.mubr.bf16.mxu0 %v557
    %989 = vmatmul.mubr.bf16.gmra.mrb[0].mxu0 %v556
    %v990 = vpop.f32.mrb[0].mxu0
    %v991 = vadd.f32 %v629, %v990
    %v992 = vpop.f32.mrb[0].mxu0
    %v993 = vadd.f32 %v633, %v992
    %v994 = vpop.f32.mrb[0].mxu0
    %v995 = vpop.f32.mrb[0].mxu0
    %996 = vdwg.mxu0
    %997 = vmatprep.subr.bf16.mxu0 %v861
    %998 = vmatpush1.bf16.msra.mxu0 %v860
    %999 = vmatprep.subr.bf16.mxu0 %v863
    %1000 = vmatpush1.bf16.msra.mxu0 %v862
    %1001 = vmatprep.subr.bf16.mxu0 %v865
    %1002 = vmatpush1.bf16.msra.mxu0 %v864
    %1003 = vmatprep.subr.bf16.mxu0 %v867
    %1004 = vmatpush1.bf16.msra.mxu0 %v866
    %1005 = vmatprep.subr.bf16.mxu0 %v869
    %1006 = vmatpush1.bf16.msra.mxu0 %v868
    %1007 = vmatprep.subr.bf16.mxu0 %v871
    %1008 = vmatpush1.bf16.msra.mxu0 %v870
    %1009 = vmatprep.subr.bf16.mxu0 %v873
    %1010 = vmatpush1.bf16.msra.mxu0 %v872
    %1011 = vmatprep.subr.bf16.mxu0 %v875
    %1012 = vmatpush1.bf16.msra.mxu0 %v874
    %1013 = vmatprep.subr.bf16.mxu0 %v877
    %1014 = vmatpush1.bf16.msra.mxu0 %v876
    %1015 = vmatprep.subr.bf16.mxu0 %v879
    %1016 = vmatpush1.bf16.msra.mxu0 %v878
    %1017 = vmatprep.subr.bf16.mxu0 %v881
    %1018 = vmatpush1.bf16.msra.mxu0 %v880
    %1019 = vmatprep.subr.bf16.mxu0 %v883
    %1020 = vmatpush1.bf16.msra.mxu0 %v882
    %1021 = vmatprep.subr.bf16.mxu0 %v885
    %1022 = vmatpush1.bf16.msra.mxu0 %v884
    %1023 = vmatprep.subr.bf16.mxu0 %v887
    %1024 = vmatpush1.bf16.msra.mxu0 %v886
    %1025 = vmatprep.subr.bf16.mxu0 %v889
    %1026 = vmatpush1.bf16.msra.mxu0 %v888
    %1027 = vmatprep.subr.bf16.mxu0 %v891
    %1028 = vmatpush1.bf16.msra.mxu0 %v890
    %1029 = vmatprep.mubr.bf16.mxu0 %v559
    %1030 = vmatmul.mubr.bf16.gmra.mrb[0].mxu0 %v558
    %v1031 = vpop.f32.mrb[0].mxu0
    %v1032 = vadd.f32 %v991, %v1031
    %v1033 = vpop.f32.mrb[0].mxu0
    %v1034 = vadd.f32 %v993, %v1033
    %v1035 = vpop.f32.mrb[0].mxu0
    %v1036 = vpop.f32.mrb[0].mxu0
    %1037 = vdwg.mxu0
    %v1038 = vadd.f32 %v1032, %v60
    %v1039 = vadd.f32 %v1034, %v61
    %1040 = vst [vmem:[#allocation8] sm:$0xff] %v1038
    %1041 = vst [vmem:[#allocation8 + $0x8] sm:$0xff] %v1039
    // Predicated region
    $region34: #{mlp_forward.1} parent=1 // pred_check
      _
    $region35: #{mlp_forward.1} parent=1 // pred_check_branch
      %1043 = sbr.rel (0) target = $region37
    $region36: #{mlp_forward.1} parent=1 // pred_region
      %s1045 = ssub.s32 256, 256
      %1046 = vsyncadd [#allocation4], %s1045
      %s1048 = sshll.u32 [#allocation8], 4
      %s1049 = int_to_ptr.vmem [resolvable:$true] %s1048
      %1051 = dma.vmem_to_hbm [thread:$0]  %s1049, 256, %s5, [#allocation4]
    $region37: #{mlp_forward.1} parent=1 // pred_fallthru
      _
    // Predicated region
    $region38: #{mlp_forward.1} parent=1 // pred_check
      _
    $region39: #{mlp_forward.1} parent=1 // pred_check_branch
      %1053 = sbr.rel (0) target = $region41
    $region40: #{mlp_forward.1} parent=1 // pred_region
      %1054 = dma.done [#allocation4], 256
    $region41: #{mlp_forward.1} parent=1 // pred_fallthru
      _
    %1055 = vsyncpa [#allocation3], 1
    %1056 = vsyncpa [#allocation6], 1
    %1057 = vsyncpa [#allocation4], 1

</llo_original>
